<compile_context>
chip_gen: v7x
topology: tpu7x:2x2x1
jax: 0.10.0
libtpu: 0.0.40
codegen_flags: <defaults>
</compile_context>

<pallas_src>
import functools

import jax
import jax.numpy as jnp
from jax.experimental import pallas as pl
from jax.experimental.pallas import tpu as pltpu


def _fdm_kernel(obs_ref, act_ref, w1o_ref, w1a_ref, b1_ref, w2_ref, b2_ref,
                o_ref):
    """Fused MLP tile: out = relu(obs@W1o + act@W1a + b1) @ W2 + b2."""
    w_dtype = w1o_ref.dtype
    # First layer: concat(obs, act) @ W1 expressed as two MXU dots into one
    # f32 accumulator (avoids materializing the concat anywhere).
    h = jnp.dot(obs_ref[...].astype(w_dtype), w1o_ref[...],
                preferred_element_type=jnp.float32)
    h = h + jnp.dot(act_ref[...].astype(w_dtype), w1a_ref[...],
                    preferred_element_type=jnp.float32)
    # Bias add + ReLU in f32 on the VPU (b1 is (1, hidden), broadcasts).
    h = jnp.maximum(h + b1_ref[...].astype(jnp.float32), 0.0)
    # Second layer.
    o = jnp.dot(h.astype(w_dtype), w2_ref[...],
                preferred_element_type=jnp.float32)
    o = o + b2_ref[...].astype(jnp.float32)
    o_ref[...] = o.astype(o_ref.dtype)


def _round_up(x, m):
    return ((x + m - 1) // m) * m


@functools.partial(jax.jit, static_argnames=("block_b",))
def forward_dynamics_model(obs, pred_actions, params, *, block_b=2048):
    """obs: (B, latent_dim), pred_actions: (B, action_dim).

    Returns predicted next-obs of shape (B, latent_dim).
    """
    w1, b1, w2, b2 = params["w1"], params["b1"], params["w2"], params["b2"]
    B, latent_dim = obs.shape
    action_dim = pred_actions.shape[1]
    hidden = w1.shape[1]

    # Split W1 so the concat never materializes (static slices, tiny weights).
    w1_obs = w1[:latent_dim, :]
    w1_act = w1[latent_dim:, :]

    # Batch tile: large to amortize per-grid-step overhead (rows are narrow),
    # clamped to the (8-aligned) batch for small inputs.
    tb = min(block_b, _round_up(B, 8))
    b_pad = _round_up(B, tb)
    if b_pad != B:
        obs = jnp.pad(obs, ((0, b_pad - B), (0, 0)))
        pred_actions = jnp.pad(pred_actions, ((0, b_pad - B), (0, 0)))
    grid = (b_pad // tb,)

    in_dim = latent_dim + action_dim
    itemsize = jnp.dtype(obs.dtype).itemsize
    w_itemsize = jnp.dtype(w1.dtype).itemsize
    cost = pl.CostEstimate(
        flops=2 * b_pad * (in_dim * hidden + hidden * latent_dim),
        transcendentals=0,
        bytes_accessed=(
            b_pad * (latent_dim + action_dim + latent_dim) * itemsize
            + (in_dim * hidden + hidden + hidden * latent_dim + latent_dim)
            * w_itemsize),
    )

    # TODO(synk): latent_dim=32 (<128 lanes) means masked vst on the output;
    # making the store lane-dense would require fusing the downstream ICM loss
    # (or padding W2's output columns to 128 and slicing afterwards), which
    # changes the module boundary, so it is left as-is here.
    out = pl.pallas_call(
        _fdm_kernel,
        out_shape=jax.ShapeDtypeStruct((b_pad, latent_dim), obs.dtype),
        grid=grid,
        in_specs=[
            pl.BlockSpec((tb, latent_dim), lambda i: (i, 0)),      # obs tile
            pl.BlockSpec((tb, action_dim), lambda i: (i, 0)),      # act tile
            pl.BlockSpec((latent_dim, hidden), lambda i: (0, 0)),  # W1[:lat]
            pl.BlockSpec((action_dim, hidden), lambda i: (0, 0)),  # W1[lat:]
            pl.BlockSpec((1, hidden), lambda i: (0, 0)),           # b1
            pl.BlockSpec((hidden, latent_dim), lambda i: (0, 0)),  # W2
            pl.BlockSpec((1, latent_dim), lambda i: (0, 0)),       # b2
        ],
        out_specs=pl.BlockSpec((tb, latent_dim), lambda i: (i, 0)),
        compiler_params=pltpu.CompilerParams(
            dimension_semantics=("parallel",)),
        cost_estimate=cost,
    )(obs, pred_actions, w1_obs, w1_act, b1, w2, b2)

    if b_pad != B:
        out = out[:B]
    return out


def init_params(key, latent_dim, action_dim, hidden=256, dtype=jnp.float32):
    """Deterministic init matching nn.Linear shapes (stored as (in, out)).

    For v6e/v7x, pass dtype=jnp.bfloat16 to get the native bf16 MXU path
    (activation math stays in f32 inside the kernel).
    """
    k1, k2, k3, k4 = jax.random.split(key, 4)
    in_dim = latent_dim + action_dim
    # torch default Linear init: U(-1/sqrt(fan_in), 1/sqrt(fan_in))
    bound1 = 1.0 / jnp.sqrt(in_dim)
    bound2 = 1.0 / jnp.sqrt(hidden)
    return {
        "w1": jax.random.uniform(k1, (in_dim, hidden), dtype, -bound1, bound1),
        "b1": jax.random.uniform(k2, (1, hidden), dtype, -bound1, bound1),
        "w2": jax.random.uniform(k3, (hidden, latent_dim), dtype, -bound2,
                                 bound2),
        "b2": jax.random.uniform(k4, (1, latent_dim), dtype, -bound2, bound2),
    }


def _reference(obs, pred_actions, params):
    x = jnp.concatenate([obs, pred_actions], axis=1)
    h = jnp.maximum(x @ params["w1"] + params["b1"], 0.0)
    return h @ params["w2"] + params["b2"]


if __name__ == "__main__":
    latent_dim = 32
    action_dim = 8
    batch = 8

    key = jax.random.PRNGKey(0)
    k_obs, k_act, k_params = jax.random.split(key, 3)

    obs = jax.random.normal(k_obs, (batch, latent_dim), jnp.float32)
    pred_actions = jax.random.normal(k_act, (batch, action_dim), jnp.float32)
    params = init_params(k_params, latent_dim, action_dim)

    out = forward_dynamics_model(obs, pred_actions, params)
    out = jax.block_until_ready(out)

    ref = _reference(obs, pred_actions, params)
    assert out.shape == (batch, latent_dim)
    assert jnp.allclose(out, ref, atol=1e-5, rtol=1e-5)

    # Also exercise the tiled path (multiple grid steps + ragged batch).
    batch2 = 5130
    k_o2, k_a2 = jax.random.split(jax.random.PRNGKey(1))
    obs2 = jax.random.normal(k_o2, (batch2, latent_dim), jnp.float32)
    act2 = jax.random.normal(k_a2, (batch2, action_dim), jnp.float32)
    out2 = jax.block_until_ready(
        forward_dynamics_model(obs2, act2, params, block_b=2048))
    ref2 = _reference(obs2, act2, params)
    assert out2.shape == (batch2, latent_dim)
    assert jnp.allclose(out2, ref2, atol=1e-5, rtol=1e-5)

    print("KERNEL_OK")
</pallas_src>

<mosaic_0001>
module attributes {stable_mosaic.version = 11 : i64} {
  func.func @_fdm_kernel(%arg0: i32, %arg1: memref<8x32xf32, #tpu.memory_space<vmem>>, %arg2: memref<8x8xf32, #tpu.memory_space<vmem>>, %arg3: memref<32x256xf32, #tpu.memory_space<vmem>>, %arg4: memref<8x256xf32, #tpu.memory_space<vmem>>, %arg5: memref<1x256xf32, #tpu.memory_space<vmem>>, %arg6: memref<256x32xf32, #tpu.memory_space<vmem>>, %arg7: memref<1x32xf32, #tpu.memory_space<vmem>>, %arg8: memref<8x32xf32, #tpu.memory_space<vmem>>) attributes {dimension_semantics = [#tpu.dimension_semantics<parallel>], iteration_bounds = array<i64: 1>, scalar_prefetch = 0 : i64, scratch_operands = 0 : i64, tpu.core_type = #tpu.core_type<tc>, window_params = [{transform_indices = @transform_0, window_bounds = array<i64: 8, 32>}, {transform_indices = @transform_1, window_bounds = array<i64: 8, 8>}, {pipeline_mode = #tpu.pipeline_mode<synchronous>, transform_indices = @transform_2, window_bounds = array<i64: 32, 256>}, {pipeline_mode = #tpu.pipeline_mode<synchronous>, transform_indices = @transform_3, window_bounds = array<i64: 8, 256>}, {pipeline_mode = #tpu.pipeline_mode<synchronous>, transform_indices = @transform_4, window_bounds = array<i64: 1, 256>}, {pipeline_mode = #tpu.pipeline_mode<synchronous>, transform_indices = @transform_5, window_bounds = array<i64: 256, 32>}, {pipeline_mode = #tpu.pipeline_mode<synchronous>, transform_indices = @transform_6, window_bounds = array<i64: 1, 32>}, {transform_indices = @transform_7, window_bounds = array<i64: 8, 32>}]} {
    %c0 = arith.constant 0 : index
    %c0_0 = arith.constant 0 : index
    %0 = vector.load %arg1[%c0, %c0_0] : memref<8x32xf32, #tpu.memory_space<vmem>>, vector<8x32xf32>
    %c0_1 = arith.constant 0 : index
    %c0_2 = arith.constant 0 : index
    %1 = vector.load %arg3[%c0_1, %c0_2] : memref<32x256xf32, #tpu.memory_space<vmem>>, vector<32x256xf32>
    %cst = arith.constant dense<0.000000e+00> : vector<8x256xf32>
    %2 = tpu.matmul %0, %1, %cst {dimension_numbers = #tpu.dot_dimension_numbers<[1], [0], [0], [1], [0, 0, 1, 1], [], []>} : vector<8x32xf32>, vector<32x256xf32>, vector<8x256xf32> -> vector<8x256xf32>
    %c0_3 = arith.constant 0 : index
    %c0_4 = arith.constant 0 : index
    %3 = vector.load %arg2[%c0_3, %c0_4] : memref<8x8xf32, #tpu.memory_space<vmem>>, vector<8x8xf32>
    %c0_5 = arith.constant 0 : index
    %c0_6 = arith.constant 0 : index
    %4 = vector.load %arg4[%c0_5, %c0_6] : memref<8x256xf32, #tpu.memory_space<vmem>>, vector<8x256xf32>
    %cst_7 = arith.constant dense<0.000000e+00> : vector<8x256xf32>
    %5 = tpu.matmul %3, %4, %cst_7 {dimension_numbers = #tpu.dot_dimension_numbers<[1], [0], [0], [1], [0, 0, 1, 1], [], []>} : vector<8x8xf32>, vector<8x256xf32>, vector<8x256xf32> -> vector<8x256xf32>
    %6 = arith.addf %2, %5 : vector<8x256xf32>
    %c0_8 = arith.constant 0 : index
    %c0_9 = arith.constant 0 : index
    %7 = vector.load %arg5[%c0_8, %c0_9] : memref<1x256xf32, #tpu.memory_space<vmem>>, vector<1x256xf32>
    %8 = vector.broadcast %7 : vector<1x256xf32> to vector<8x256xf32>
    %9 = arith.addf %6, %8 : vector<8x256xf32>
    %cst_10 = arith.constant 0.000000e+00 : f32
    %10 = vector.broadcast %cst_10 : f32 to vector<8x256xf32>
    %11 = arith.maximumf %9, %10 : vector<8x256xf32>
    %c0_11 = arith.constant 0 : index
    %c0_12 = arith.constant 0 : index
    %12 = vector.load %arg6[%c0_11, %c0_12] : memref<256x32xf32, #tpu.memory_space<vmem>>, vector<256x32xf32>
    %cst_13 = arith.constant dense<0.000000e+00> : vector<8x32xf32>
    %13 = tpu.matmul %11, %12, %cst_13 {dimension_numbers = #tpu.dot_dimension_numbers<[1], [0], [0], [1], [0, 0, 1, 1], [], []>} : vector<8x256xf32>, vector<256x32xf32>, vector<8x32xf32> -> vector<8x32xf32>
    %c0_14 = arith.constant 0 : index
    %c0_15 = arith.constant 0 : index
    %14 = vector.load %arg7[%c0_14, %c0_15] : memref<1x32xf32, #tpu.memory_space<vmem>>, vector<1x32xf32>
    %15 = vector.broadcast %14 : vector<1x32xf32> to vector<8x32xf32>
    %16 = arith.addf %13, %15 : vector<8x32xf32>
    %c0_16 = arith.constant 0 : index
    %c0_17 = arith.constant 0 : index
    %17 = vector.load %arg8[%c0_16, %c0_17] : memref<8x32xf32, #tpu.memory_space<vmem>>, vector<8x32xf32>
    tpu.vector_store %arg8[%c0_16, %c0_17], %16 {strides = array<i32>} : memref<8x32xf32, #tpu.memory_space<vmem>>, vector<8x32xf32>,
    return
  }
  func.func @transform_0(%arg0: i32) -> (i32, i32) {
    %c0_i32 = arith.constant 0 : i32
    %c0_i32_0 = arith.constant 0 : i32
    return %arg0, %c0_i32 : i32, i32
  }
  func.func @transform_1(%arg0: i32) -> (i32, i32) {
    %c0_i32 = arith.constant 0 : i32
    %c0_i32_0 = arith.constant 0 : i32
    return %arg0, %c0_i32 : i32, i32
  }
  func.func @transform_2(%arg0: i32) -> (i32, i32) {
    %c0_i32 = arith.constant 0 : i32
    %c0_i32_0 = arith.constant 0 : i32
    %c0_i32_1 = arith.constant 0 : i32
    return %c0_i32, %c0_i32_0 : i32, i32
  }
  func.func @transform_3(%arg0: i32) -> (i32, i32) {
    %c0_i32 = arith.constant 0 : i32
    %c0_i32_0 = arith.constant 0 : i32
    %c0_i32_1 = arith.constant 0 : i32
    return %c0_i32, %c0_i32_0 : i32, i32
  }
  func.func @transform_4(%arg0: i32) -> (i32, i32) {
    %c0_i32 = arith.constant 0 : i32
    %c0_i32_0 = arith.constant 0 : i32
    %c0_i32_1 = arith.constant 0 : i32
    return %c0_i32, %c0_i32_0 : i32, i32
  }
  func.func @transform_5(%arg0: i32) -> (i32, i32) {
    %c0_i32 = arith.constant 0 : i32
    %c0_i32_0 = arith.constant 0 : i32
    %c0_i32_1 = arith.constant 0 : i32
    return %c0_i32, %c0_i32_0 : i32, i32
  }
  func.func @transform_6(%arg0: i32) -> (i32, i32) {
    %c0_i32 = arith.constant 0 : i32
    %c0_i32_0 = arith.constant 0 : i32
    %c0_i32_1 = arith.constant 0 : i32
    return %c0_i32, %c0_i32_0 : i32, i32
  }
  func.func @transform_7(%arg0: i32) -> (i32, i32) {
    %c0_i32 = arith.constant 0 : i32
    %c0_i32_0 = arith.constant 0 : i32
    return %arg0, %c0_i32 : i32, i32
  }
}

</mosaic_0001>

<llo_original>
// kernel: forward_dynamics_model.1
$region0: #{forward_dynamics_model.1}
  #allocation0 [shape = 'u32[]', space=smem, size = 0x4, offset = 0x4, fixed_abs, tag = 'smem constant byte address 0x4 - core index']
  #allocation1 [shape = 'u32[144,128]{1,0:T(1,128)}', space=vmem, size = 0x12000, scoped, tag = 'internal scratch']
  %s0 = inlined_call_operand.vmem [shape: f32[8,32], index: 0, kind: input, shape index: {}]
  %s1 = inlined_call_operand.vmem [shape: f32[8,8], index: 1, kind: input, shape index: {}]
  %s2 = inlined_call_operand.vmem [shape: f32[32,256], index: 2, kind: input, shape index: {}]
  %s3 = inlined_call_operand.vmem [shape: f32[8,256], index: 3, kind: input, shape index: {}]
  %s4 = inlined_call_operand.vmem [shape: f32[1,256], index: 4, kind: input, shape index: {}]
  %s5 = inlined_call_operand.vmem [shape: f32[256,32], index: 5, kind: input, shape index: {}]
  %s6 = inlined_call_operand.vmem [shape: f32[1,32], index: 6, kind: input, shape index: {}]
  %s7 = inlined_call_operand.hbm [shape: f32[8,32], index: 7, kind: output, shape index: {}]
  %s8 = sld [smem:[#allocation0]]
  $region38: #{forward_dynamics_model.1} parent=0
    _
  %s10 = ssub.s32 1, %s8
  %s11 = scalar_select 0, %s10, %s8
  $region1: #{forward_dynamics_model.1} parent=0
    #allocation2 [shape = 'u8[4096]{0}', space=vmem, size = 0x1000, scoped, tag = 'output window, operand 0, single buffered']
    #allocation3 [shape = 's32[1]{0}', space=sflag, size = 0x4, scoped, tag = 'scoped memory for forward_dynamics_model.1']
    %12 = vsyncpa [#allocation3], 0
    // Predicated region
    $region2: #{forward_dynamics_model.1} parent=1 // pred_check
      _
    $region3: #{forward_dynamics_model.1} parent=1 // pred_check_branch
      %14 = sbr.rel (0) target = $region5
    $region4: #{forward_dynamics_model.1} parent=1 // pred_region
      _
    $region5: #{forward_dynamics_model.1} parent=1 // pred_fallthru
      _
    // Predicated region
    $region6: #{forward_dynamics_model.1} parent=1 // pred_check
      _
    $region7: #{forward_dynamics_model.1} parent=1 // pred_check_branch
      %16 = sbr.rel (0) target = $region9
    $region8: #{forward_dynamics_model.1} parent=1 // pred_region
      _
    $region9: #{forward_dynamics_model.1} parent=1 // pred_fallthru
      _
    // Predicated region
    $region10: #{forward_dynamics_model.1} parent=1 // pred_check
      _
    $region11: #{forward_dynamics_model.1} parent=1 // pred_check_branch
      %18 = sbr.rel (0) target = $region13
    $region12: #{forward_dynamics_model.1} parent=1 // pred_region
      _
    $region13: #{forward_dynamics_model.1} parent=1 // pred_fallthru
      _
    // Predicated region
    $region14: #{forward_dynamics_model.1} parent=1 // pred_check
      _
    $region15: #{forward_dynamics_model.1} parent=1 // pred_check_branch
      %20 = sbr.rel (0) target = $region17
    $region16: #{forward_dynamics_model.1} parent=1 // pred_region
      _
    $region17: #{forward_dynamics_model.1} parent=1 // pred_fallthru
      _
    // Predicated region
    $region18: #{forward_dynamics_model.1} parent=1 // pred_check
      _
    $region19: #{forward_dynamics_model.1} parent=1 // pred_check_branch
      %22 = sbr.rel (0) target = $region21
    $region20: #{forward_dynamics_model.1} parent=1 // pred_region
      _
    $region21: #{forward_dynamics_model.1} parent=1 // pred_fallthru
      _
    // Predicated region
    $region22: #{forward_dynamics_model.1} parent=1 // pred_check
      _
    $region23: #{forward_dynamics_model.1} parent=1 // pred_check_branch
      %24 = sbr.rel (0) target = $region25
    $region24: #{forward_dynamics_model.1} parent=1 // pred_region
      _
    $region25: #{forward_dynamics_model.1} parent=1 // pred_fallthru
      _
    // Predicated region
    $region26: #{forward_dynamics_model.1} parent=1 // pred_check
      _
    $region27: #{forward_dynamics_model.1} parent=1 // pred_check_branch
      %26 = sbr.rel (0) target = $region29
    $region28: #{forward_dynamics_model.1} parent=1 // pred_region
      _
    $region29: #{forward_dynamics_model.1} parent=1 // pred_fallthru
      _
    %v27 = vld [vmem:[%s0] sm:$0xff]
    %v28 = vld [vmem:[%s2] sm:$0xff]
    %v29 = vld [vmem:[%s2 + $0x8] sm:$0xff]
    %v30 = vld [vmem:[%s2 + $0x10] sm:$0xff]
    %v31 = vld [vmem:[%s2 + $0x18] sm:$0xff]
    %v32 = vld [vmem:[%s2 + $0x20] sm:$0xff]
    %v33 = vld [vmem:[%s2 + $0x28] sm:$0xff]
    %v34 = vld [vmem:[%s2 + $0x30] sm:$0xff]
    %v35 = vld [vmem:[%s2 + $0x38] sm:$0xff]
    %v36 = vld [vmem:[%s1] sm:$0xff]
    %v37 = vld [vmem:[%s3] sm:$0xff]
    %v38 = vld [vmem:[%s3 + $0x8] sm:$0xff]
    %vm39 = vcmask 64512
    %v41 = vsel %vm39, %v36, 0
    %43 = vmatprep.subr.mxu0 %v38
    %44 = vmatpush1.msra.mxu0 %v37
    %45 = vmatprep.subr.mxu0 0.0
    %46 = vmatpush1.msra.mxu0 0.0
    %47 = vmatprep.subr.mxu0 0.0
    %48 = vmatpush1.msra.mxu0 0.0
    %49 = vmatprep.subr.mxu0 0.0
    %50 = vmatpush1.msra.mxu0 0.0
    %51 = vmatprep.subr.mxu0 0.0
    %52 = vmatpush1.msra.mxu0 0.0
    %53 = vmatprep.subr.mxu0 0.0
    %54 = vmatpush1.msra.mxu0 0.0
    %55 = vmatprep.subr.mxu0 0.0
    %56 = vmatpush1.msra.mxu0 0.0
    %57 = vmatprep.subr.mxu0 0.0
    %58 = vmatpush1.msra.mxu0 0.0
    %59 = vmatprep.subr.mxu0 0.0
    %60 = vmatpush1.msra.mxu0 0.0
    %61 = vmatprep.subr.mxu0 0.0
    %62 = vmatpush1.msra.mxu0 0.0
    %63 = vmatprep.subr.mxu0 0.0
    %64 = vmatpush1.msra.mxu0 0.0
    %65 = vmatprep.subr.mxu0 0.0
    %66 = vmatpush1.msra.mxu0 0.0
    %67 = vmatprep.subr.mxu0 0.0
    %68 = vmatpush1.msra.mxu0 0.0
    %69 = vmatprep.subr.mxu0 0.0
    %70 = vmatpush1.msra.mxu0 0.0
    %71 = vmatprep.subr.mxu0 0.0
    %72 = vmatpush1.msra.mxu0 0.0
    %73 = vmatprep.subr.mxu0 0.0
    %74 = vmatpush1.msra.mxu0 0.0
    %75 = vmatprep.subr.mxu0 0.0
    %76 = vmatpush1.msra.mxu0 0.0
    %77 = vmatprep.subr.mxu0 0.0
    %78 = vmatpush1.msra.mxu0 0.0
    %79 = vmatprep.subr.mxu0 0.0
    %80 = vmatpush1.msra.mxu0 0.0
    %81 = vmatprep.subr.mxu0 0.0
    %82 = vmatpush1.msra.mxu0 0.0
    %83 = vmatprep.subr.mxu0 0.0
    %84 = vmatpush1.msra.mxu0 0.0
    %85 = vmatprep.subr.mxu0 0.0
    %86 = vmatpush1.msra.mxu0 0.0
    %87 = vmatprep.subr.mxu0 0.0
    %88 = vmatpush1.msra.mxu0 0.0
    %89 = vmatprep.subr.mxu0 0.0
    %90 = vmatpush1.msra.mxu0 0.0
    %91 = vmatprep.subr.mxu0 0.0
    %92 = vmatpush1.msra.mxu0 0.0
    %93 = vmatprep.subr.mxu0 0.0
    %94 = vmatpush1.msra.mxu0 0.0
    %95 = vmatprep.subr.mxu0 0.0
    %96 = vmatpush1.msra.mxu0 0.0
    %97 = vmatprep.subr.mxu0 0.0
    %98 = vmatpush1.msra.mxu0 0.0
    %99 = vmatprep.subr.mxu0 0.0
    %100 = vmatpush1.msra.mxu0 0.0
    %101 = vmatprep.subr.mxu0 0.0
    %102 = vmatpush1.msra.mxu0 0.0
    %103 = vmatprep.subr.mxu0 0.0
    %104 = vmatpush1.msra.mxu0 0.0
    %105 = vmatprep.subr.mxu0 0.0
    %106 = vmatpush1.msra.mxu0 0.0
    %107 = vmatprep.mubr.f32.mxu0 0.0
    %108 = vmatmul.mubr.f32.gmra.mrb[0].mxu0 %v41
    %v109 = vpop.f32.mrb[0].mxu0
    %v110 = vadd.f32 0.0, %v109
    %v111 = vpop.f32.mrb[0].mxu0
    %v112 = vadd.f32 0.0, %v111
    %113 = vdwg.mxu0
    %vm114 = vcmask 261120
    %v116 = vsel %vm114, %v27, 0
    %118 = vmatprep.subr.mxu0 %v29
    %119 = vmatpush1.msra.mxu0 %v28
    %120 = vmatprep.subr.mxu0 %v31
    %121 = vmatpush1.msra.mxu0 %v30
    %122 = vmatprep.subr.mxu0 %v33
    %123 = vmatpush1.msra.mxu0 %v32
    %124 = vmatprep.subr.mxu0 %v35
    %125 = vmatpush1.msra.mxu0 %v34
    %126 = vmatprep.subr.mxu0 0.0
    %127 = vmatpush1.msra.mxu0 0.0
    %128 = vmatprep.subr.mxu0 0.0
    %129 = vmatpush1.msra.mxu0 0.0
    %130 = vmatprep.subr.mxu0 0.0
    %131 = vmatpush1.msra.mxu0 0.0
    %132 = vmatprep.subr.mxu0 0.0
    %133 = vmatpush1.msra.mxu0 0.0
    %134 = vmatprep.subr.mxu0 0.0
    %135 = vmatpush1.msra.mxu0 0.0
    %136 = vmatprep.subr.mxu0 0.0
    %137 = vmatpush1.msra.mxu0 0.0
    %138 = vmatprep.subr.mxu0 0.0
    %139 = vmatpush1.msra.mxu0 0.0
    %140 = vmatprep.subr.mxu0 0.0
    %141 = vmatpush1.msra.mxu0 0.0
    %142 = vmatprep.subr.mxu0 0.0
    %143 = vmatpush1.msra.mxu0 0.0
    %144 = vmatprep.subr.mxu0 0.0
    %145 = vmatpush1.msra.mxu0 0.0
    %146 = vmatprep.subr.mxu0 0.0
    %147 = vmatpush1.msra.mxu0 0.0
    %148 = vmatprep.subr.mxu0 0.0
    %149 = vmatpush1.msra.mxu0 0.0
    %150 = vmatprep.subr.mxu0 0.0
    %151 = vmatpush1.msra.mxu0 0.0
    %152 = vmatprep.subr.mxu0 0.0
    %153 = vmatpush1.msra.mxu0 0.0
    %154 = vmatprep.subr.mxu0 0.0
    %155 = vmatpush1.msra.mxu0 0.0
    %156 = vmatprep.subr.mxu0 0.0
    %157 = vmatpush1.msra.mxu0 0.0
    %158 = vmatprep.subr.mxu0 0.0
    %159 = vmatpush1.msra.mxu0 0.0
    %160 = vmatprep.subr.mxu0 0.0
    %161 = vmatpush1.msra.mxu0 0.0
    %162 = vmatprep.subr.mxu0 0.0
    %163 = vmatpush1.msra.mxu0 0.0
    %164 = vmatprep.subr.mxu0 0.0
    %165 = vmatpush1.msra.mxu0 0.0
    %166 = vmatprep.subr.mxu0 0.0
    %167 = vmatpush1.msra.mxu0 0.0
    %168 = vmatprep.subr.mxu0 0.0
    %169 = vmatpush1.msra.mxu0 0.0
    %170 = vmatprep.subr.mxu0 0.0
    %171 = vmatpush1.msra.mxu0 0.0
    %172 = vmatprep.subr.mxu0 0.0
    %173 = vmatpush1.msra.mxu0 0.0
    %174 = vmatprep.subr.mxu0 0.0
    %175 = vmatpush1.msra.mxu0 0.0
    %176 = vmatprep.subr.mxu0 0.0
    %177 = vmatpush1.msra.mxu0 0.0
    %178 = vmatprep.subr.mxu0 0.0
    %179 = vmatpush1.msra.mxu0 0.0
    %180 = vmatprep.subr.mxu0 0.0
    %181 = vmatpush1.msra.mxu0 0.0
    %182 = vmatprep.mubr.f32.mxu0 0.0
    %183 = vmatmul.mubr.f32.gmra.mrb[0].mxu0 %v116
    %v184 = vpop.f32.mrb[0].mxu0
    %v185 = vadd.f32 %v110, %v184
    %v186 = vpop.f32.mrb[0].mxu0
    %v187 = vadd.f32 %v112, %v186
    %188 = vdwg.mxu0
    %v189 = vld [vmem:[%s4] sm:$0x3]
    %v191 = vlaneseq
    %v192 = vshrl.u32 %v191, 7
    %v193 = vsub.s32 0, %v192
    %v194 = vrot.slane %v189, %v193
    %v195 = vlaneseq
    %v196 = vshrl.u32 %v195, 7
    %v197 = vsub.s32 1, %v196
    %v198 = vrot.slane %v189, %v197
    %v201 = vadd.f32 %v185, %v194
    %v202 = vadd.f32 %v187, %v198
    %v203 = vmax.f32 %v201, 0.0
    %v204 = vmax.f32 %v202, 0.0
    %v205 = vld [vmem:[%s5] sm:$0xff]
    %v206 = vld [vmem:[%s5 + $0x8] sm:$0xff]
    %v207 = vld [vmem:[%s5 + $0x10] sm:$0xff]
    %v208 = vld [vmem:[%s5 + $0x18] sm:$0xff]
    %v209 = vld [vmem:[%s5 + $0x20] sm:$0xff]
    %v210 = vld [vmem:[%s5 + $0x28] sm:$0xff]
    %v211 = vld [vmem:[%s5 + $0x30] sm:$0xff]
    %v212 = vld [vmem:[%s5 + $0x38] sm:$0xff]
    %v213 = vld [vmem:[%s5 + $0x40] sm:$0xff]
    %v214 = vld [vmem:[%s5 + $0x48] sm:$0xff]
    %v215 = vld [vmem:[%s5 + $0x50] sm:$0xff]
    %v216 = vld [vmem:[%s5 + $0x58] sm:$0xff]
    %v217 = vld [vmem:[%s5 + $0x60] sm:$0xff]
    %v218 = vld [vmem:[%s5 + $0x68] sm:$0xff]
    %v219 = vld [vmem:[%s5 + $0x70] sm:$0xff]
    %v220 = vld [vmem:[%s5 + $0x78] sm:$0xff]
    %v221 = vld [vmem:[%s5 + $0x80] sm:$0xff]
    %v222 = vld [vmem:[%s5 + $0x88] sm:$0xff]
    %v223 = vld [vmem:[%s5 + $0x90] sm:$0xff]
    %v224 = vld [vmem:[%s5 + $0x98] sm:$0xff]
    %v225 = vld [vmem:[%s5 + $0xa0] sm:$0xff]
    %v226 = vld [vmem:[%s5 + $0xa8] sm:$0xff]
    %v227 = vld [vmem:[%s5 + $0xb0] sm:$0xff]
    %v228 = vld [vmem:[%s5 + $0xb8] sm:$0xff]
    %v229 = vld [vmem:[%s5 + $0xc0] sm:$0xff]
    %v230 = vld [vmem:[%s5 + $0xc8] sm:$0xff]
    %v231 = vld [vmem:[%s5 + $0xd0] sm:$0xff]
    %v232 = vld [vmem:[%s5 + $0xd8] sm:$0xff]
    %v233 = vld [vmem:[%s5 + $0xe0] sm:$0xff]
    %v234 = vld [vmem:[%s5 + $0xe8] sm:$0xff]
    %v235 = vld [vmem:[%s5 + $0xf0] sm:$0xff]
    %v236 = vld [vmem:[%s5 + $0xf8] sm:$0xff]
    %v237 = vld [vmem:[%s6] sm:$0x1]
    %v239 = vlaneseq
    %v240 = vshrl.u32 %v239, 7
    %v241 = vsub.s32 0, %v240
    %v242 = vrot.slane %v237, %v241
    %244 = vmatprep.subr.mxu0 0.0
    %245 = vmatpush1.msra.mxu0 %v205
    %246 = vmatprep.subr.mxu0 0.0
    %247 = vmatpush1.msra.mxu0 %v206
    %248 = vmatprep.subr.mxu0 0.0
    %249 = vmatpush1.msra.mxu0 %v207
    %250 = vmatprep.subr.mxu0 0.0
    %251 = vmatpush1.msra.mxu0 %v208
    %252 = vmatprep.subr.mxu0 0.0
    %253 = vmatpush1.msra.mxu0 %v209
    %254 = vmatprep.subr.mxu0 0.0
    %255 = vmatpush1.msra.mxu0 %v210
    %256 = vmatprep.subr.mxu0 0.0
    %257 = vmatpush1.msra.mxu0 %v211
    %258 = vmatprep.subr.mxu0 0.0
    %259 = vmatpush1.msra.mxu0 %v212
    %260 = vmatprep.subr.mxu0 0.0
    %261 = vmatpush1.msra.mxu0 %v213
    %262 = vmatprep.subr.mxu0 0.0
    %263 = vmatpush1.msra.mxu0 %v214
    %264 = vmatprep.subr.mxu0 0.0
    %265 = vmatpush1.msra.mxu0 %v215
    %266 = vmatprep.subr.mxu0 0.0
    %267 = vmatpush1.msra.mxu0 %v216
    %268 = vmatprep.subr.mxu0 0.0
    %269 = vmatpush1.msra.mxu0 %v217
    %270 = vmatprep.subr.mxu0 0.0
    %271 = vmatpush1.msra.mxu0 %v218
    %272 = vmatprep.subr.mxu0 0.0
    %273 = vmatpush1.msra.mxu0 %v219
    %274 = vmatprep.subr.mxu0 0.0
    %275 = vmatpush1.msra.mxu0 %v220
    %276 = vmatprep.subr.mxu0 0.0
    %277 = vmatpush1.msra.mxu0 %v221
    %278 = vmatprep.subr.mxu0 0.0
    %279 = vmatpush1.msra.mxu0 %v222
    %280 = vmatprep.subr.mxu0 0.0
    %281 = vmatpush1.msra.mxu0 %v223
    %282 = vmatprep.subr.mxu0 0.0
    %283 = vmatpush1.msra.mxu0 %v224
    %284 = vmatprep.subr.mxu0 0.0
    %285 = vmatpush1.msra.mxu0 %v225
    %286 = vmatprep.subr.mxu0 0.0
    %287 = vmatpush1.msra.mxu0 %v226
    %288 = vmatprep.subr.mxu0 0.0
    %289 = vmatpush1.msra.mxu0 %v227
    %290 = vmatprep.subr.mxu0 0.0
    %291 = vmatpush1.msra.mxu0 %v228
    %292 = vmatprep.subr.mxu0 0.0
    %293 = vmatpush1.msra.mxu0 %v229
    %294 = vmatprep.subr.mxu0 0.0
    %295 = vmatpush1.msra.mxu0 %v230
    %296 = vmatprep.subr.mxu0 0.0
    %297 = vmatpush1.msra.mxu0 %v231
    %298 = vmatprep.subr.mxu0 0.0
    %299 = vmatpush1.msra.mxu0 %v232
    %300 = vmatprep.subr.mxu0 0.0
    %301 = vmatpush1.msra.mxu0 %v233
    %302 = vmatprep.subr.mxu0 0.0
    %303 = vmatpush1.msra.mxu0 %v234
    %304 = vmatprep.subr.mxu0 0.0
    %305 = vmatpush1.msra.mxu0 %v235
    %306 = vmatprep.subr.mxu0 0.0
    %307 = vmatpush1.msra.mxu0 %v236
    %308 = vmatprep.mubr.f32.mxu0 %v204
    %309 = vmatmul.mubr.f32.gmra.mrb[0].mxu0 %v203
    %v310 = vpop.f32.mrb[0].mxu0
    %v311 = vadd.f32 %v242, %v310
    %v312 = vpop.f32.mrb[0].mxu0
    %313 = vdwg.mxu0
    %314 = vst.msk [vmem:[#allocation2] sm:$0xff] %vm114, %v311
    // Predicated region
    $region30: #{forward_dynamics_model.1} parent=1 // pred_check
      _
    $region31: #{forward_dynamics_model.1} parent=1 // pred_check_branch
      %316 = sbr.rel (0) target = $region33
    $region32: #{forward_dynamics_model.1} parent=1 // pred_region
      %s318 = ssub.s32 128, 128
      %319 = vsyncadd [#allocation3], %s318
      %s321 = sshll.u32 [#allocation2], 4
      %s322 = int_to_ptr.vmem [resolvable:$true] %s321
      %324 = dma.vmem_to_hbm [thread:$0]  %s322, 128, %s7, [#allocation3]
    $region33: #{forward_dynamics_model.1} parent=1 // pred_fallthru
      _
    // Predicated region
    $region34: #{forward_dynamics_model.1} parent=1 // pred_check
      _
    $region35: #{forward_dynamics_model.1} parent=1 // pred_check_branch
      %326 = sbr.rel (0) target = $region37
    $region36: #{forward_dynamics_model.1} parent=1 // pred_region
      %327 = dma.done [#allocation3], 128
    $region37: #{forward_dynamics_model.1} parent=1 // pred_fallthru
      _
    %328 = vsyncpa [#allocation3], 1

</llo_original>
